<compile_context>
chip_gen: v5e
topology: v5e:2x2
jax: 0.10.0
libtpu: 0.0.40
codegen_flags: <defaults>
</compile_context>

<pallas_src>
import functools
from typing import NamedTuple

import numpy as np

import jax
import jax.numpy as jnp
from jax.experimental import pallas as pl
from jax.experimental.pallas import tpu as pltpu


def _round_up(x: int, m: int) -> int:
    return (x + m - 1) // m * m


def _vmem_budget_bytes() -> int:
    """Per-chip VMEM budget, leaving headroom for Mosaic internal scratch."""
    phys = None
    try:
        info = pltpu.get_tpu_info()
        for attr in ("vmem_capacity_bytes", "vmem_size_bytes", "vmem_bytes"):
            v = getattr(info, attr, None)
            if v:
                phys = int(v)
                break
    except Exception:
        phys = None
    if not phys:
        # Unknown chip: assume the smallest (v7x-sized, 64 MiB) VMEM.
        phys = 64 * 1024 * 1024
    headroom = max(8 * 1024 * 1024, phys // 8)   # v7x: 8 MiB, v5e/v6e: 16 MiB
    return phys - headroom


# ---------------------------------------------------------------------------
# Stage 1: xw = inputs @ weight   (tiny, lane-dense padded output)
# ---------------------------------------------------------------------------
def _xw_kernel(x_ref, w_ref, o_ref):
    o_ref[...] = jnp.dot(
        x_ref[...], w_ref[...], preferred_element_type=jnp.float32
    ).astype(o_ref.dtype)


def _compute_xw(inputs_p, weight_p, *, row_tile, out_dtype):
    n_rows, din = inputs_p.shape
    dout_p = weight_p.shape[1]
    return pl.pallas_call(
        _xw_kernel,
        out_shape=jax.ShapeDtypeStruct((n_rows, dout_p), out_dtype),
        grid=(n_rows // row_tile,),
        in_specs=[
            pl.BlockSpec((row_tile, din), lambda i: (i, 0)),   # inputs rows
            pl.BlockSpec((din, dout_p), lambda i: (0, 0)),     # weight (resident)
        ],
        out_specs=pl.BlockSpec((row_tile, dout_p), lambda i: (i, 0)),
        compiler_params=pltpu.CompilerParams(
            dimension_semantics=("parallel",)),
    )(inputs_p, weight_p)


# ---------------------------------------------------------------------------
# Adjacency preparation (hoisted out of forward): pad + cast + block schedule
# ---------------------------------------------------------------------------
class PreparedAdj(NamedTuple):
    adj_p: jax.Array       # [n_pr, n_pc] padded, compute-dtype adjacency
    rows: jax.Array        # [n_steps] int32 output row-tile per grid step
    cols: jax.Array        # [n_steps] int32 adj column-block per grid step
    firsts: jax.Array      # [n_steps] int32 flag: first block of its row tile
    lasts: jax.Array       # [n_steps] int32 flag: last block of its row tile
    tm: int
    tk: int
    n_pr: int
    n_pc: int
    n: int
    compute_dtype: object


def _build_flat_schedule(nz_np, n_i, n_k):
    rows, cols, firsts, lasts = [], [], [], []
    for i in range(n_i):
        ids = np.nonzero(nz_np[i])[0]
        if ids.size == 0:
            # Dummy zero block so the (all-zero) output row tile is still
            # visited, zero-initialized and written out.
            ids = np.zeros((1,), dtype=np.int64)
        for j, kb in enumerate(ids):
            rows.append(i)
            cols.append(int(kb))
            firsts.append(1 if j == 0 else 0)
            lasts.append(1 if j == ids.size - 1 else 0)
    return (np.asarray(rows, np.int32), np.asarray(cols, np.int32),
            np.asarray(firsts, np.int32), np.asarray(lasts, np.int32))


def prepare_adjacency(adj, *, tm=512, tk=512, compute_dtype=jnp.bfloat16):
    """One-time pad + cast of adj and block-sparsity schedule construction.

    Call this once (e.g. at module construction) and reuse the result; it is
    the expensive N^2 pass the forward kernel should not repeat per call.
    """
    N = adj.shape[0]
    assert adj.shape == (N, N)
    assert tm % 128 == 0 and tk % 128 == 0
    tm = min(tm, _round_up(N, 128))
    tk = min(tk, _round_up(N, 128))
    n_pr = _round_up(N, tm)
    n_pc = _round_up(N, tk)
    adj_p = jnp.pad(jnp.asarray(adj),
                    ((0, n_pr - N), (0, n_pc - N))).astype(compute_dtype)

    n_i, n_k = n_pr // tm, n_pc // tk
    try:
        # Small one-time device reduction + tiny (n_i x n_k) host transfer.
        nz = jnp.any(adj_p.reshape(n_i, tm, n_k, tk) != 0, axis=(1, 3))
        nz_np = np.asarray(jax.device_get(nz)).astype(bool)
    except Exception:
        # adj is traced (e.g. prepare called under jit): dense schedule.
        nz_np = np.ones((n_i, n_k), dtype=bool)

    rows, cols, firsts, lasts = _build_flat_schedule(nz_np, n_i, n_k)
    return PreparedAdj(
        adj_p=adj_p,
        rows=jnp.asarray(rows), cols=jnp.asarray(cols),
        firsts=jnp.asarray(firsts), lasts=jnp.asarray(lasts),
        tm=tm, tk=tk, n_pr=n_pr, n_pc=n_pc, n=N,
        compute_dtype=jnp.dtype(compute_dtype))


# ---------------------------------------------------------------------------
# Stage 2: out = elu(adj @ xw), flattened block-sparse schedule
# ---------------------------------------------------------------------------
def _adj_xw_kernel(rows_ref, cols_ref, first_ref, last_ref,
                   adj_ref, xw_ref, o_ref, acc_ref, *,
                   tk, activation, resident_xw):
    s = pl.program_id(0)

    @pl.when(first_ref[s] == 1)
    def _init():
        acc_ref[...] = jnp.zeros_like(acc_ref)

    if resident_xw:
        # xw fully resident in VMEM; slice the column block of this step.
        start = pl.multiple_of(cols_ref[s] * tk, tk)
        xw_blk = xw_ref[pl.ds(start, tk), :]
    else:
        # xw streamed per column block by the BlockSpec.
        xw_blk = xw_ref[...]
    acc_ref[...] += jnp.dot(adj_ref[...], xw_blk,
                            preferred_element_type=jnp.float32)

    @pl.when(last_ref[s] == 1)
    def _epilogue():
        h = acc_ref[...]
        if activation:
            h = jnp.where(h > 0.0, h, jnp.expm1(h))   # ELU, alpha = 1
        o_ref[...] = h.astype(o_ref.dtype)


def _forward(inputs, weight, prep: PreparedAdj, activation):
    N = prep.n
    assert inputs.shape[0] == N
    din = inputs.shape[1]
    din_w, dout = weight.shape
    assert din == din_w
    out_dtype = inputs.dtype
    compute_dtype = prep.compute_dtype
    tm, tk, n_pr, n_pc = prep.tm, prep.tk, prep.n_pr, prep.n_pc
    dout_p = _round_up(max(dout, 128), 128)     # lane-dense output width

    inputs_p = jnp.pad(inputs.astype(jnp.float32), ((0, n_pc - N), (0, 0)))
    weight_p = jnp.pad(weight.astype(jnp.float32), ((0, 0), (0, dout_p - dout)))

    # --- stage 1: xw = inputs @ weight (row tile decoupled from tk) ---------
    s1_tile = min(1024, n_pc)
    while n_pc % s1_tile:
        s1_tile -= 128
    xw = _compute_xw(inputs_p, weight_p, row_tile=s1_tile,
                     out_dtype=compute_dtype)

    # --- stage 2 VMEM accounting --------------------------------------------
    cdt = jnp.dtype(compute_dtype).itemsize
    odt = jnp.dtype(out_dtype).itemsize
    budget = _vmem_budget_bytes()
    base = (2 * tm * tk * cdt          # adj tile (double buffered)
            + 2 * tm * dout_p * odt    # output tile (double buffered)
            + tm * dout_p * 4)         # f32 accumulator
    xw_bytes = n_pc * dout_p * cdt
    resident_xw = int((base + xw_bytes) * 1.25) <= budget
    vmem_need = base + (xw_bytes if resident_xw else 2 * tk * dout_p * cdt)
    vmem_limit = int(min(max(int(vmem_need * 1.5), 32 * 1024 * 1024), budget))

    n_steps = int(prep.rows.shape[0])
    kernel = functools.partial(_adj_xw_kernel, tk=tk, activation=activation,
                               resident_xw=resident_xw)

    def run(single_buffer_xw):
        if resident_xw:
            if single_buffer_xw:
                # Never-changing block: one buffer halves the largest VMEM user
                # (matters on v7x's 64 MiB / per-TC duplication).
                xw_spec = pl.BlockSpec((n_pc, dout_p),
                                       lambda s, r, c, f, l: (0, 0),
                                       pipeline_mode=pl.Buffered(1))
            else:
                xw_spec = pl.BlockSpec((n_pc, dout_p),
                                       lambda s, r, c, f, l: (0, 0))
        else:
            # xw re-streamed per nonzero block (extra traffic ~ dout_p / tm).
            xw_spec = pl.BlockSpec((tk, dout_p),
                                   lambda s, r, c, f, l: (c[s], 0))
        return pl.pallas_call(
            kernel,
            out_shape=jax.ShapeDtypeStruct((n_pr, dout_p), out_dtype),
            grid_spec=pltpu.PrefetchScalarGridSpec(
                num_scalar_prefetch=4,
                grid=(n_steps,),
                in_specs=[
                    # adj: data-dependent (row-tile, col-block) from schedule.
                    pl.BlockSpec((tm, tk), lambda s, r, c, f, l: (r[s], c[s])),
                    xw_spec,
                ],
                out_specs=pl.BlockSpec((tm, dout_p),
                                       lambda s, r, c, f, l: (r[s], 0)),
                scratch_shapes=[pltpu.VMEM((tm, dout_p), jnp.float32)],
            ),
            compiler_params=pltpu.CompilerParams(
                dimension_semantics=("arbitrary",),
                vmem_limit_bytes=vmem_limit,
            ),
        )(prep.rows, prep.cols, prep.firsts, prep.lasts, prep.adj_p, xw)

    try:
        out_p = run(single_buffer_xw=True)
    except Exception:
        # Compatibility fallback if single-buffering the resident xw is
        # rejected by this Pallas/Mosaic version.
        out_p = run(single_buffer_xw=False)

    # Slice away lane / row padding outside the kernel.
    return out_p[:N, :dout]


def graph_conv_sparse(inputs, weight, adj, activation=True, *,
                      compute_dtype=jnp.bfloat16, tm=512, tk=512):
    """Pallas implementation of GraphConvSparse.forward.

    inputs : [N, Din] node features
    weight : [Din, Dout]
    adj    : [N, N] dense (row-normalized) adjacency, OR a PreparedAdj from
             prepare_adjacency().  Pass a PreparedAdj for repeated calls so
             the pad/cast and block-sparsity schedule are not rebuilt.
    """
    if isinstance(adj, PreparedAdj):
        prep = adj
    else:
        prep = prepare_adjacency(adj, tm=tm, tk=tk, compute_dtype=compute_dtype)
    return _forward(inputs, weight, prep, activation)


# ---------------------------------------------------------------------------
# Module-style wrapper (mirrors the PyTorch GraphConvSparse)
# ---------------------------------------------------------------------------
def glorot_init(key, input_dim, output_dim, dtype=jnp.float32):
    # Matches PyTorch glorot_init: uniform in [-r, r], r = sqrt(6/(in+out))
    init_range = jnp.sqrt(6.0 / (input_dim + output_dim))
    u = jax.random.uniform(key, (input_dim, output_dim), dtype=dtype)
    return u * 2.0 * init_range - init_range


class GraphConvSparse:
    """JAX/Pallas port: adjacency prep is done ONCE at construction."""

    def __init__(self, input_dim, output_dim, adj, activation=True, *,
                 key=None, compute_dtype=jnp.bfloat16, tm=512, tk=512):
        if key is None:
            key = jax.random.PRNGKey(0)
        self.weight = glorot_init(key, input_dim, output_dim)
        self.activation = activation
        self.adj = prepare_adjacency(adj, tm=tm, tk=tk,
                                     compute_dtype=compute_dtype)

    def __call__(self, inputs):
        return graph_conv_sparse(inputs, self.weight, self.adj,
                                 activation=self.activation)


def reference_forward(inputs, weight, adj, activation=True):
    x = jnp.dot(inputs, weight, precision=jax.lax.Precision.HIGHEST)
    x = jnp.dot(adj, x, precision=jax.lax.Precision.HIGHEST)
    if activation:
        x = jnp.where(x > 0, x, jnp.expm1(x))
    return x


# TODO(synk): accept a true sparse (indices/values) adjacency; block sparsity
#             is currently derived from a dense adj at prepare time.
# TODO(synk): optional int8 (v5e/v6e) / fp8-e4m3 (v7x) adjacency quantization
#             with per-row scales folded into the epilogue would halve stage-2
#             HBM traffic.


if __name__ == "__main__":
    key = jax.random.PRNGKey(0)
    k_w, k_x, k_a = jax.random.split(key, 3)

    # Small but multi-tile shapes so block skipping / padding paths run.
    N = 384            # number of graph nodes
    input_dim = 64     # input feature dim
    output_dim = 32    # output feature dim (hidden size)

    weight = glorot_init(k_w, input_dim, output_dim)
    inputs = jax.random.normal(k_x, (N, input_dim), dtype=jnp.float32)

    # Deterministic symmetric, row-normalized, block-tridiagonal adjacency
    # (dense stand-in for the sparse adj carried by the PyTorch module).
    blk = 128
    nb = N // blk
    a_raw = (jax.random.uniform(k_a, (N, N)) < 0.1).astype(jnp.float32)
    a_sym = jnp.maximum(a_raw, a_raw.T) + jnp.eye(N, dtype=jnp.float32)
    bi = jnp.arange(nb)
    bmask = (jnp.abs(bi[:, None] - bi[None, :]) <= 1).astype(jnp.float32)
    bmask_full = jnp.repeat(jnp.repeat(bmask, blk, axis=0), blk, axis=1)
    a_sym = a_sym * bmask_full
    deg = jnp.sum(a_sym, axis=1, keepdims=True)
    adj = a_sym / deg

    ref_act = reference_forward(inputs, weight, adj, activation=True)
    ref_noact = reference_forward(inputs, weight, adj, activation=False)

    # 1) Module-style usage: pad/cast + flattened block-sparse schedule built
    #    once at construction; f32 compute, 128-tiles -> off-tridiagonal
    #    adjacency blocks are skipped entirely.
    layer = GraphConvSparse(input_dim, output_dim, adj, activation=True,
                            key=k_w, compute_dtype=jnp.float32, tm=128, tk=128)
    out_f32 = jax.block_until_ready(layer(inputs))
    assert out_f32.shape == (N, output_dim)
    assert jnp.allclose(out_f32, ref_act, atol=2e-4, rtol=2e-4), \
        "f32 path mismatch vs reference"

    # 2) bf16-streamed adj/xw (default compute dtype), f32 accumulation.
    out_bf16 = jax.block_until_ready(
        graph_conv_sparse(inputs, weight, adj, activation=True,
                          tm=128, tk=128))
    assert jnp.allclose(out_bf16, ref_act, atol=5e-2, rtol=5e-2), \
        "bf16 path mismatch vs reference"

    # 3) No-activation path with default (large) tiles -> single-block schedule
    #    and N padding handled in-kernel.
    out_noact = jax.block_until_ready(
        graph_conv_sparse(inputs, weight, adj, activation=False,
                          compute_dtype=jnp.float32))
    assert jnp.allclose(out_noact, ref_noact, atol=2e-4, rtol=2e-4), \
        "no-activation path mismatch vs reference"

    print("KERNEL_OK")
</pallas_src>

<mosaic_0001>
module attributes {stable_mosaic.version = 11 : i64} {
  func.func @_xw_kernel(%arg0: i32, %arg1: memref<384x64xf32, #tpu.memory_space<vmem>>, %arg2: memref<64x128xf32, #tpu.memory_space<vmem>>, %arg3: memref<384x128xf32, #tpu.memory_space<vmem>>) attributes {dimension_semantics = [#tpu.dimension_semantics<parallel>], iteration_bounds = array<i64: 1>, scalar_prefetch = 0 : i64, scratch_operands = 0 : i64, tpu.core_type = #tpu.core_type<tc>, window_params = [{transform_indices = @transform_0, window_bounds = array<i64: 384, 64>}, {pipeline_mode = #tpu.pipeline_mode<synchronous>, transform_indices = @transform_1, window_bounds = array<i64: 64, 128>}, {transform_indices = @transform_2, window_bounds = array<i64: 384, 128>}]} {
    %c0 = arith.constant 0 : index
    %c0_0 = arith.constant 0 : index
    %0 = vector.load %arg1[%c0, %c0_0] : memref<384x64xf32, #tpu.memory_space<vmem>>, vector<384x64xf32>
    %c0_1 = arith.constant 0 : index
    %c0_2 = arith.constant 0 : index
    %1 = vector.load %arg2[%c0_1, %c0_2] : memref<64x128xf32, #tpu.memory_space<vmem>>, vector<64x128xf32>
    %cst = arith.constant dense<0.000000e+00> : vector<384x128xf32>
    %2 = tpu.matmul %0, %1, %cst {dimension_numbers = #tpu.dot_dimension_numbers<[1], [0], [0], [1], [0, 0, 1, 1], [], []>} : vector<384x64xf32>, vector<64x128xf32>, vector<384x128xf32> -> vector<384x128xf32>
    %c0_3 = arith.constant 0 : index
    %c0_4 = arith.constant 0 : index
    %3 = vector.load %arg3[%c0_3, %c0_4] : memref<384x128xf32, #tpu.memory_space<vmem>>, vector<384x128xf32>
    tpu.vector_store %arg3[%c0_3, %c0_4], %2 {strides = array<i32>} : memref<384x128xf32, #tpu.memory_space<vmem>>, vector<384x128xf32>,
    return
  }
  func.func @transform_0(%arg0: i32) -> (i32, i32) {
    %c0_i32 = arith.constant 0 : i32
    %c0_i32_0 = arith.constant 0 : i32
    return %arg0, %c0_i32 : i32, i32
  }
  func.func @transform_1(%arg0: i32) -> (i32, i32) {
    %c0_i32 = arith.constant 0 : i32
    %c0_i32_0 = arith.constant 0 : i32
    %c0_i32_1 = arith.constant 0 : i32
    return %c0_i32, %c0_i32_0 : i32, i32
  }
  func.func @transform_2(%arg0: i32) -> (i32, i32) {
    %c0_i32 = arith.constant 0 : i32
    %c0_i32_0 = arith.constant 0 : i32
    return %arg0, %c0_i32 : i32, i32
  }
}

</mosaic_0001>

<llo_original>
// kernel: tpu_custom_call.1
$region0: #{tpu_custom_call.1}
  #allocation0 [shape = 'u32[]', space=smem, size = 0x4, offset = 0x4, fixed_abs, tag = 'smem constant byte address 0x4 - core index']
  #allocation1 [shape = 'u32[72,128]{1,0:T(1,128)}', space=vmem, size = 0x9000, scoped, tag = 'internal scratch']
  %s0 = inlined_call_operand.vmem [shape: f32[384,64], index: 0, kind: input, shape index: {}]
  %s1 = inlined_call_operand.vmem [shape: f32[64,128], index: 1, kind: input, shape index: {}]
  %s2 = inlined_call_operand.hbm [shape: f32[384,128], index: 2, kind: output, shape index: {}]
  %s3 = sld [smem:[#allocation0]]
  $region18: #{tpu_custom_call.1} parent=0
    _
  %s5 = ssub.s32 1, %s3
  %s6 = scalar_select 0, %s5, %s3
  $region1: #{tpu_custom_call.1} parent=0
    #allocation2 [shape = 'u8[196608]{0}', space=vmem, size = 0x30000, scoped, tag = 'output window, operand 0, single buffered']
    #allocation3 [shape = 's32[1]{0}', space=sflag, size = 0x4, scoped, tag = 'scoped memory for tpu_custom_call.1']
    %7 = vsyncpa [#allocation3], 0
    // Predicated region
    $region2: #{tpu_custom_call.1} parent=1 // pred_check
      _
    $region3: #{tpu_custom_call.1} parent=1 // pred_check_branch
      %9 = sbr.rel (0) target = $region5
    $region4: #{tpu_custom_call.1} parent=1 // pred_region
      _
    $region5: #{tpu_custom_call.1} parent=1 // pred_fallthru
      _
    // Predicated region
    $region6: #{tpu_custom_call.1} parent=1 // pred_check
      _
    $region7: #{tpu_custom_call.1} parent=1 // pred_check_branch
      %11 = sbr.rel (0) target = $region9
    $region8: #{tpu_custom_call.1} parent=1 // pred_region
      _
    $region9: #{tpu_custom_call.1} parent=1 // pred_fallthru
      _
    %v12 = vld [vmem:[%s0] sm:$0xff]
    %v13 = vld [vmem:[%s0 + $0x8] sm:$0xff]
    %v14 = vld [vmem:[%s0 + $0x10] sm:$0xff]
    %v15 = vld [vmem:[%s0 + $0x18] sm:$0xff]
    %v16 = vld [vmem:[%s0 + $0x20] sm:$0xff]
    %v17 = vld [vmem:[%s0 + $0x28] sm:$0xff]
    %v18 = vld [vmem:[%s0 + $0x30] sm:$0xff]
    %v19 = vld [vmem:[%s0 + $0x38] sm:$0xff]
    %v20 = vld [vmem:[%s0 + $0x40] sm:$0xff]
    %v21 = vld [vmem:[%s0 + $0x48] sm:$0xff]
    %v22 = vld [vmem:[%s0 + $0x50] sm:$0xff]
    %v23 = vld [vmem:[%s0 + $0x58] sm:$0xff]
    %v24 = vld [vmem:[%s0 + $0x60] sm:$0xff]
    %v25 = vld [vmem:[%s0 + $0x68] sm:$0xff]
    %v26 = vld [vmem:[%s0 + $0x70] sm:$0xff]
    %v27 = vld [vmem:[%s0 + $0x78] sm:$0xff]
    %v28 = vld [vmem:[%s0 + $0x80] sm:$0xff]
    %v29 = vld [vmem:[%s0 + $0x88] sm:$0xff]
    %v30 = vld [vmem:[%s0 + $0x90] sm:$0xff]
    %v31 = vld [vmem:[%s0 + $0x98] sm:$0xff]
    %v32 = vld [vmem:[%s0 + $0xa0] sm:$0xff]
    %v33 = vld [vmem:[%s0 + $0xa8] sm:$0xff]
    %v34 = vld [vmem:[%s0 + $0xb0] sm:$0xff]
    %v35 = vld [vmem:[%s0 + $0xb8] sm:$0xff]
    %v36 = vld [vmem:[%s0 + $0xc0] sm:$0xff]
    %v37 = vld [vmem:[%s0 + $0xc8] sm:$0xff]
    %v38 = vld [vmem:[%s0 + $0xd0] sm:$0xff]
    %v39 = vld [vmem:[%s0 + $0xd8] sm:$0xff]
    %v40 = vld [vmem:[%s0 + $0xe0] sm:$0xff]
    %v41 = vld [vmem:[%s0 + $0xe8] sm:$0xff]
    %v42 = vld [vmem:[%s0 + $0xf0] sm:$0xff]
    %v43 = vld [vmem:[%s0 + $0xf8] sm:$0xff]
    %v44 = vld [vmem:[%s0 + $0x100] sm:$0xff]
    %v45 = vld [vmem:[%s0 + $0x108] sm:$0xff]
    %v46 = vld [vmem:[%s0 + $0x110] sm:$0xff]
    %v47 = vld [vmem:[%s0 + $0x118] sm:$0xff]
    %v48 = vld [vmem:[%s0 + $0x120] sm:$0xff]
    %v49 = vld [vmem:[%s0 + $0x128] sm:$0xff]
    %v50 = vld [vmem:[%s0 + $0x130] sm:$0xff]
    %v51 = vld [vmem:[%s0 + $0x138] sm:$0xff]
    %v52 = vld [vmem:[%s0 + $0x140] sm:$0xff]
    %v53 = vld [vmem:[%s0 + $0x148] sm:$0xff]
    %v54 = vld [vmem:[%s0 + $0x150] sm:$0xff]
    %v55 = vld [vmem:[%s0 + $0x158] sm:$0xff]
    %v56 = vld [vmem:[%s0 + $0x160] sm:$0xff]
    %v57 = vld [vmem:[%s0 + $0x168] sm:$0xff]
    %v58 = vld [vmem:[%s0 + $0x170] sm:$0xff]
    %v59 = vld [vmem:[%s0 + $0x178] sm:$0xff]
    %v60 = vld [vmem:[%s1] sm:$0xff]
    %v61 = vld [vmem:[%s1 + $0x8] sm:$0xff]
    %v62 = vld [vmem:[%s1 + $0x10] sm:$0xff]
    %v63 = vld [vmem:[%s1 + $0x18] sm:$0xff]
    %v64 = vld [vmem:[%s1 + $0x20] sm:$0xff]
    %v65 = vld [vmem:[%s1 + $0x28] sm:$0xff]
    %v66 = vld [vmem:[%s1 + $0x30] sm:$0xff]
    %v67 = vld [vmem:[%s1 + $0x38] sm:$0xff]
    %vm68 = vcmask 523264
    %v70 = vsel %vm68, %v12, 0
    %v73 = vsel %vm68, %v13, 0
    %v76 = vsel %vm68, %v14, 0
    %v79 = vsel %vm68, %v15, 0
    %v82 = vsel %vm68, %v16, 0
    %v85 = vsel %vm68, %v17, 0
    %v88 = vsel %vm68, %v18, 0
    %v91 = vsel %vm68, %v19, 0
    %v94 = vsel %vm68, %v20, 0
    %v97 = vsel %vm68, %v21, 0
    %v100 = vsel %vm68, %v22, 0
    %v103 = vsel %vm68, %v23, 0
    %v106 = vsel %vm68, %v24, 0
    %v109 = vsel %vm68, %v25, 0
    %v112 = vsel %vm68, %v26, 0
    %v115 = vsel %vm68, %v27, 0
    %v118 = vsel %vm68, %v28, 0
    %v121 = vsel %vm68, %v29, 0
    %v124 = vsel %vm68, %v30, 0
    %v127 = vsel %vm68, %v31, 0
    %v130 = vsel %vm68, %v32, 0
    %v133 = vsel %vm68, %v33, 0
    %v136 = vsel %vm68, %v34, 0
    %v139 = vsel %vm68, %v35, 0
    %v142 = vsel %vm68, %v36, 0
    %v145 = vsel %vm68, %v37, 0
    %v148 = vsel %vm68, %v38, 0
    %v151 = vsel %vm68, %v39, 0
    %v154 = vsel %vm68, %v40, 0
    %v157 = vsel %vm68, %v41, 0
    %v160 = vsel %vm68, %v42, 0
    %v163 = vsel %vm68, %v43, 0
    %v166 = vsel %vm68, %v44, 0
    %v169 = vsel %vm68, %v45, 0
    %v172 = vsel %vm68, %v46, 0
    %v175 = vsel %vm68, %v47, 0
    %v178 = vsel %vm68, %v48, 0
    %v181 = vsel %vm68, %v49, 0
    %v184 = vsel %vm68, %v50, 0
    %v187 = vsel %vm68, %v51, 0
    %v190 = vsel %vm68, %v52, 0
    %v193 = vsel %vm68, %v53, 0
    %v196 = vsel %vm68, %v54, 0
    %v199 = vsel %vm68, %v55, 0
    %v202 = vsel %vm68, %v56, 0
    %v205 = vsel %vm68, %v57, 0
    %v208 = vsel %vm68, %v58, 0
    %v211 = vsel %vm68, %v59, 0
    %213 = vmatpush.msra.mxu0 0.0
    %214 = vmatpush.msra.mxu0 0.0
    %215 = vmatpush.msra.mxu0 0.0
    %216 = vmatpush.msra.mxu0 0.0
    %217 = vmatpush.msra.mxu0 0.0
    %218 = vmatpush.msra.mxu0 0.0
    %219 = vmatpush.msra.mxu0 0.0
    %220 = vmatpush.msra.mxu0 0.0
    %221 = vmatpush.msra.mxu0 %v67
    %222 = vmatpush.msra.mxu0 %v66
    %223 = vmatpush.msra.mxu0 %v65
    %224 = vmatpush.msra.mxu0 %v64
    %225 = vmatpush.msra.mxu0 %v63
    %226 = vmatpush.msra.mxu0 %v62
    %227 = vmatpush.msra.mxu0 %v61
    %228 = vmatpush.msra.mxu0 %v60
    %229 = vmatmul.f32.gmra.mxu0 %v70
    %v230 = vpop.f32.mrf.mxu0
    %v231 = vadd.f32 0.0, %v230
    %232 = vmatmul.f32.gmra.mxu0 %v73
    %v233 = vpop.f32.mrf.mxu0
    %v234 = vadd.f32 0.0, %v233
    %235 = vmatmul.f32.gmra.mxu0 %v76
    %v236 = vpop.f32.mrf.mxu0
    %v237 = vadd.f32 0.0, %v236
    %238 = vmatmul.f32.gmra.mxu0 %v79
    %v239 = vpop.f32.mrf.mxu0
    %v240 = vadd.f32 0.0, %v239
    %241 = vmatmul.f32.gmra.mxu0 %v82
    %v242 = vpop.f32.mrf.mxu0
    %v243 = vadd.f32 0.0, %v242
    %244 = vmatmul.f32.gmra.mxu0 %v85
    %v245 = vpop.f32.mrf.mxu0
    %v246 = vadd.f32 0.0, %v245
    %247 = vmatmul.f32.gmra.mxu0 %v88
    %v248 = vpop.f32.mrf.mxu0
    %v249 = vadd.f32 0.0, %v248
    %250 = vmatmul.f32.gmra.mxu0 %v91
    %v251 = vpop.f32.mrf.mxu0
    %v252 = vadd.f32 0.0, %v251
    %253 = vmatmul.f32.gmra.mxu0 %v94
    %v254 = vpop.f32.mrf.mxu0
    %v255 = vadd.f32 0.0, %v254
    %256 = vmatmul.f32.gmra.mxu0 %v97
    %v257 = vpop.f32.mrf.mxu0
    %v258 = vadd.f32 0.0, %v257
    %259 = vmatmul.f32.gmra.mxu0 %v100
    %v260 = vpop.f32.mrf.mxu0
    %v261 = vadd.f32 0.0, %v260
    %262 = vmatmul.f32.gmra.mxu0 %v103
    %v263 = vpop.f32.mrf.mxu0
    %v264 = vadd.f32 0.0, %v263
    %265 = vmatmul.f32.gmra.mxu0 %v106
    %v266 = vpop.f32.mrf.mxu0
    %v267 = vadd.f32 0.0, %v266
    %268 = vmatmul.f32.gmra.mxu0 %v109
    %v269 = vpop.f32.mrf.mxu0
    %v270 = vadd.f32 0.0, %v269
    %271 = vmatmul.f32.gmra.mxu0 %v112
    %v272 = vpop.f32.mrf.mxu0
    %v273 = vadd.f32 0.0, %v272
    %274 = vmatmul.f32.gmra.mxu0 %v115
    %v275 = vpop.f32.mrf.mxu0
    %v276 = vadd.f32 0.0, %v275
    %277 = vmatmul.f32.gmra.mxu0 %v118
    %v278 = vpop.f32.mrf.mxu0
    %v279 = vadd.f32 0.0, %v278
    %280 = vmatmul.f32.gmra.mxu0 %v121
    %v281 = vpop.f32.mrf.mxu0
    %v282 = vadd.f32 0.0, %v281
    %283 = vmatmul.f32.gmra.mxu0 %v124
    %v284 = vpop.f32.mrf.mxu0
    %v285 = vadd.f32 0.0, %v284
    %286 = vmatmul.f32.gmra.mxu0 %v127
    %v287 = vpop.f32.mrf.mxu0
    %v288 = vadd.f32 0.0, %v287
    %289 = vmatmul.f32.gmra.mxu0 %v130
    %v290 = vpop.f32.mrf.mxu0
    %v291 = vadd.f32 0.0, %v290
    %292 = vmatmul.f32.gmra.mxu0 %v133
    %v293 = vpop.f32.mrf.mxu0
    %v294 = vadd.f32 0.0, %v293
    %295 = vmatmul.f32.gmra.mxu0 %v136
    %v296 = vpop.f32.mrf.mxu0
    %v297 = vadd.f32 0.0, %v296
    %298 = vmatmul.f32.gmra.mxu0 %v139
    %v299 = vpop.f32.mrf.mxu0
    %v300 = vadd.f32 0.0, %v299
    %301 = vmatmul.f32.gmra.mxu0 %v142
    %v302 = vpop.f32.mrf.mxu0
    %v303 = vadd.f32 0.0, %v302
    %304 = vmatmul.f32.gmra.mxu0 %v145
    %v305 = vpop.f32.mrf.mxu0
    %v306 = vadd.f32 0.0, %v305
    %307 = vmatmul.f32.gmra.mxu0 %v148
    %v308 = vpop.f32.mrf.mxu0
    %v309 = vadd.f32 0.0, %v308
    %310 = vmatmul.f32.gmra.mxu0 %v151
    %v311 = vpop.f32.mrf.mxu0
    %v312 = vadd.f32 0.0, %v311
    %313 = vmatmul.f32.gmra.mxu0 %v154
    %v314 = vpop.f32.mrf.mxu0
    %v315 = vadd.f32 0.0, %v314
    %316 = vmatmul.f32.gmra.mxu0 %v157
    %v317 = vpop.f32.mrf.mxu0
    %v318 = vadd.f32 0.0, %v317
    %319 = vmatmul.f32.gmra.mxu0 %v160
    %v320 = vpop.f32.mrf.mxu0
    %v321 = vadd.f32 0.0, %v320
    %322 = vmatmul.f32.gmra.mxu0 %v163
    %v323 = vpop.f32.mrf.mxu0
    %v324 = vadd.f32 0.0, %v323
    %325 = vmatmul.f32.gmra.mxu0 %v166
    %v326 = vpop.f32.mrf.mxu0
    %v327 = vadd.f32 0.0, %v326
    %328 = vmatmul.f32.gmra.mxu0 %v169
    %v329 = vpop.f32.mrf.mxu0
    %v330 = vadd.f32 0.0, %v329
    %331 = vmatmul.f32.gmra.mxu0 %v172
    %v332 = vpop.f32.mrf.mxu0
    %v333 = vadd.f32 0.0, %v332
    %334 = vmatmul.f32.gmra.mxu0 %v175
    %v335 = vpop.f32.mrf.mxu0
    %v336 = vadd.f32 0.0, %v335
    %337 = vmatmul.f32.gmra.mxu0 %v178
    %v338 = vpop.f32.mrf.mxu0
    %v339 = vadd.f32 0.0, %v338
    %340 = vmatmul.f32.gmra.mxu0 %v181
    %v341 = vpop.f32.mrf.mxu0
    %v342 = vadd.f32 0.0, %v341
    %343 = vmatmul.f32.gmra.mxu0 %v184
    %v344 = vpop.f32.mrf.mxu0
    %v345 = vadd.f32 0.0, %v344
    %346 = vmatmul.f32.gmra.mxu0 %v187
    %v347 = vpop.f32.mrf.mxu0
    %v348 = vadd.f32 0.0, %v347
    %349 = vmatmul.f32.gmra.mxu0 %v190
    %v350 = vpop.f32.mrf.mxu0
    %v351 = vadd.f32 0.0, %v350
    %352 = vmatmul.f32.gmra.mxu0 %v193
    %v353 = vpop.f32.mrf.mxu0
    %v354 = vadd.f32 0.0, %v353
    %355 = vmatmul.f32.gmra.mxu0 %v196
    %v356 = vpop.f32.mrf.mxu0
    %v357 = vadd.f32 0.0, %v356
    %358 = vmatmul.f32.gmra.mxu0 %v199
    %v359 = vpop.f32.mrf.mxu0
    %v360 = vadd.f32 0.0, %v359
    %361 = vmatmul.f32.gmra.mxu0 %v202
    %v362 = vpop.f32.mrf.mxu0
    %v363 = vadd.f32 0.0, %v362
    %364 = vmatmul.f32.gmra.mxu0 %v205
    %v365 = vpop.f32.mrf.mxu0
    %v366 = vadd.f32 0.0, %v365
    %367 = vmatmul.f32.gmra.mxu0 %v208
    %v368 = vpop.f32.mrf.mxu0
    %v369 = vadd.f32 0.0, %v368
    %370 = vmatmul.f32.gmra.mxu0 %v211
    %v371 = vpop.f32.mrf.mxu0
    %v372 = vadd.f32 0.0, %v371
    %373 = vdwg.mxu0
    %374 = vst [vmem:[#allocation2] sm:$0xff] %v231
    %375 = vst [vmem:[#allocation2 + $0x8] sm:$0xff] %v234
    %376 = vst [vmem:[#allocation2 + $0x10] sm:$0xff] %v237
    %377 = vst [vmem:[#allocation2 + $0x18] sm:$0xff] %v240
    %378 = vst [vmem:[#allocation2 + $0x20] sm:$0xff] %v243
    %379 = vst [vmem:[#allocation2 + $0x28] sm:$0xff] %v246
    %380 = vst [vmem:[#allocation2 + $0x30] sm:$0xff] %v249
    %381 = vst [vmem:[#allocation2 + $0x38] sm:$0xff] %v252
    %382 = vst [vmem:[#allocation2 + $0x40] sm:$0xff] %v255
    %383 = vst [vmem:[#allocation2 + $0x48] sm:$0xff] %v258
    %384 = vst [vmem:[#allocation2 + $0x50] sm:$0xff] %v261
    %385 = vst [vmem:[#allocation2 + $0x58] sm:$0xff] %v264
    %386 = vst [vmem:[#allocation2 + $0x60] sm:$0xff] %v267
    %387 = vst [vmem:[#allocation2 + $0x68] sm:$0xff] %v270
    %388 = vst [vmem:[#allocation2 + $0x70] sm:$0xff] %v273
    %389 = vst [vmem:[#allocation2 + $0x78] sm:$0xff] %v276
    %390 = vst [vmem:[#allocation2 + $0x80] sm:$0xff] %v279
    %391 = vst [vmem:[#allocation2 + $0x88] sm:$0xff] %v282
    %392 = vst [vmem:[#allocation2 + $0x90] sm:$0xff] %v285
    %393 = vst [vmem:[#allocation2 + $0x98] sm:$0xff] %v288
    %394 = vst [vmem:[#allocation2 + $0xa0] sm:$0xff] %v291
    %395 = vst [vmem:[#allocation2 + $0xa8] sm:$0xff] %v294
    %396 = vst [vmem:[#allocation2 + $0xb0] sm:$0xff] %v297
    %397 = vst [vmem:[#allocation2 + $0xb8] sm:$0xff] %v300
    %398 = vst [vmem:[#allocation2 + $0xc0] sm:$0xff] %v303
    %399 = vst [vmem:[#allocation2 + $0xc8] sm:$0xff] %v306
    %400 = vst [vmem:[#allocation2 + $0xd0] sm:$0xff] %v309
    %401 = vst [vmem:[#allocation2 + $0xd8] sm:$0xff] %v312
    %402 = vst [vmem:[#allocation2 + $0xe0] sm:$0xff] %v315
    %403 = vst [vmem:[#allocation2 + $0xe8] sm:$0xff] %v318
    %404 = vst [vmem:[#allocation2 + $0xf0] sm:$0xff] %v321
    %405 = vst [vmem:[#allocation2 + $0xf8] sm:$0xff] %v324
    %406 = vst [vmem:[#allocation2 + $0x100] sm:$0xff] %v327
    %407 = vst [vmem:[#allocation2 + $0x108] sm:$0xff] %v330
    %408 = vst [vmem:[#allocation2 + $0x110] sm:$0xff] %v333
    %409 = vst [vmem:[#allocation2 + $0x118] sm:$0xff] %v336
    %410 = vst [vmem:[#allocation2 + $0x120] sm:$0xff] %v339
    %411 = vst [vmem:[#allocation2 + $0x128] sm:$0xff] %v342
    %412 = vst [vmem:[#allocation2 + $0x130] sm:$0xff] %v345
    %413 = vst [vmem:[#allocation2 + $0x138] sm:$0xff] %v348
    %414 = vst [vmem:[#allocation2 + $0x140] sm:$0xff] %v351
    %415 = vst [vmem:[#allocation2 + $0x148] sm:$0xff] %v354
    %416 = vst [vmem:[#allocation2 + $0x150] sm:$0xff] %v357
    %417 = vst [vmem:[#allocation2 + $0x158] sm:$0xff] %v360
    %418 = vst [vmem:[#allocation2 + $0x160] sm:$0xff] %v363
    %419 = vst [vmem:[#allocation2 + $0x168] sm:$0xff] %v366
    %420 = vst [vmem:[#allocation2 + $0x170] sm:$0xff] %v369
    %421 = vst [vmem:[#allocation2 + $0x178] sm:$0xff] %v372
    // Predicated region
    $region10: #{tpu_custom_call.1} parent=1 // pred_check
      _
    $region11: #{tpu_custom_call.1} parent=1 // pred_check_branch
      %423 = sbr.rel (0) target = $region13
    $region12: #{tpu_custom_call.1} parent=1 // pred_region
      %425 = vsyncadd [#allocation3], 0
      %s426 = sshll.u32 [#allocation2], 4
      %s427 = int_to_ptr.vmem [resolvable:$true] %s426
      %s428 = sshll.u32 %s2, 4
      %s429 = int_to_ptr.hbm [resolvable:$true] %s428
      %434 = dma.vmem_to_hbm [thread:$0]  %s427, 6144, %s429, [#allocation3], 128, 128, 8
    $region13: #{tpu_custom_call.1} parent=1 // pred_fallthru
      _
    // Predicated region
    $region14: #{tpu_custom_call.1} parent=1 // pred_check
      _
    $region15: #{tpu_custom_call.1} parent=1 // pred_check_branch
      %436 = sbr.rel (0) target = $region17
    $region16: #{tpu_custom_call.1} parent=1 // pred_region
      %438 = dma.done [#allocation3], 6144
    $region17: #{tpu_custom_call.1} parent=1 // pred_fallthru
      _
    %439 = vsyncpa [#allocation3], 1

</llo_original>
